<compile_context>
chip_gen: v6e
topology: v6e:2x2x1
jax: 0.10.0
libtpu: 0.0.40
codegen_flags: <defaults>
</compile_context>

<pallas_src>
import functools
import math

import jax
import jax.numpy as jnp
from jax.experimental import pallas as pl
from jax.experimental.pallas import tpu as pltpu

SELU_ALPHA = 1.6732632423543772
SELU_SCALE = 1.0507009873554805

LANE = 128      # vreg lane width: last dims padded to a multiple of this
SUBLANE = 8     # vreg sublane width: batch padded to a multiple of this
MIN_TM = 256    # keep the 256-wide MXU (v6e/v7x) filled per batch tile
MAX_TM = 512    # batch tile upper bound


def _round_up(x, m):
    return (x + m - 1) // m * m


def _physical_vmem_bytes():
    """Best-effort physical VMEM query (v5e/v6e: 128 MiB, v7x: 64 MiB/TC)."""
    try:
        return int(pltpu.get_tpu_info().vmem_capacity_bytes)
    except Exception:
        return 64 * 1024 * 1024   # assume the smallest of the three gens (v7x)


# ----------------------------------------------------------------------------- kernel
def _mlp_group_kernel(*refs, num_layers, use_bias, apply_selu):
    """One batch tile through `num_layers` Linear(+SELU) layers, fully in VMEM.

    refs layout: (x, w_0..w_{L-1}, [b_0..b_{L-1}], o)
      x   : (TM, Kin_pad_0)              zero-padded activation tile
      w_l : (Kin_pad_l, Kout_pad_l)      pre-transposed, zero-padded weights
      b_l : (1, Kout_pad_l)              zero-padded biases (only if use_bias)
      o   : (TM, Kout_pad_{L-1})         padded output tile
    """
    x_ref = refs[0]
    o_ref = refs[-1]
    w_refs = refs[1:1 + num_layers]
    b_refs = refs[1 + num_layers:1 + 2 * num_layers] if use_bias else (None,) * num_layers

    h = x_ref[...]
    # Static Python loop over a small compile-time L: unrolls into L
    # back-to-back MXU matmuls; `h` never leaves VMEM/vregs between layers.
    for l in range(num_layers):
        w = w_refs[l][...]
        lhs = h if h.dtype == w.dtype else h.astype(w.dtype)  # bf16 weights -> bf16 MXU inputs
        y = jnp.dot(lhs, w, preferred_element_type=jnp.float32)
        if use_bias:
            y = y + b_refs[l][...].astype(jnp.float32)        # (1, Kout) broadcast, VPU add
        if apply_selu:
            # SELU in f32 (v5e VPU/EUP have no bf16 path). exp(y)-1 rather than
            # expm1 for guaranteed Mosaic lowering; fwd error << 1e-5 here.
            y = SELU_SCALE * jnp.where(y > 0, y, SELU_ALPHA * (jnp.exp(y) - 1.0))
        h = y
    o_ref[...] = h.astype(o_ref.dtype)


# ----------------------------------------------------------------------------- params
def init_mlp_params(key, input_dim, hidden_dim, output_dim, layer_num, bias=True):
    """PyTorch nn.Linear-style init (U(-1/sqrt(fan_in), +)); weights stored
    PRE-TRANSPOSED as [in, out] so the forward pass never transposes."""
    assert layer_num > 0
    if layer_num == 1:
        dims = [(input_dim, output_dim)]
    else:
        dims = ([(input_dim, hidden_dim)]
                + [(hidden_dim, hidden_dim)] * (layer_num - 2)
                + [(hidden_dim, output_dim)])
    params = []
    for fan_in, fan_out in dims:
        key, kw, kb = jax.random.split(key, 3)
        bound = 1.0 / math.sqrt(fan_in)
        w_t = jax.random.uniform(kw, (fan_in, fan_out), jnp.float32, -bound, bound)
        b = (jax.random.uniform(kb, (fan_out,), jnp.float32, -bound, bound)
             if bias else jnp.zeros((fan_out,), jnp.float32))
        params.append((w_t, b))
    return params


def pack_mlp_params(params, weight_dtype=jnp.float32):
    """One-time packing: each layer padded independently to lane-dense
    [round_up(in,128), round_up(out,128)] (zero padding is SELU-safe since
    selu(0)==0).  Pass weight_dtype=jnp.bfloat16 to halve weight DMA / VMEM
    residency; the kernel still accumulates in f32."""
    ws, bs = [], []
    for (w_t, b) in params:
        kin, kout = w_t.shape
        kin_p, kout_p = _round_up(kin, LANE), _round_up(kout, LANE)
        w_pad = jnp.zeros((kin_p, kout_p), jnp.float32).at[:kin, :kout].set(w_t)
        ws.append(w_pad.astype(weight_dtype))
        bs.append(jnp.zeros((1, kout_p), jnp.float32).at[0, :kout].set(b))
    return tuple(ws), tuple(bs)


# ----------------------------------------------------------------------------- wrapper
def _choose_batch_tiling(M):
    """(TM, grid_m): <=7 padded rows, and >=2 grid steps of >=256 rows once the
    batch is big enough (keeps both v7x TensorCores and the MXU busy)."""
    M_sub = _round_up(M, SUBLANE)
    if M_sub < 2 * MIN_TM:
        return M_sub, 1
    grid_m = max(2, pl.cdiv(M_sub, MAX_TM))
    TM = max(MIN_TM, _round_up(pl.cdiv(M, grid_m), SUBLANE))
    grid_m = pl.cdiv(M, TM)
    return TM, grid_m


def _plan_layer_groups(w_stack, budget_bytes):
    """Greedily group consecutive layers so each group's resident weights fit
    the per-generation VMEM budget (one pallas_call per group)."""
    groups, cur, cur_bytes = [], [], 0
    for l, w in enumerate(w_stack):
        wb = w.size * w.dtype.itemsize
        if cur and cur_bytes + wb > budget_bytes:
            groups.append(tuple(cur))
            cur, cur_bytes = [], 0
        cur.append(l)
        cur_bytes += wb
    groups.append(tuple(cur))
    return tuple(groups)


def _mlp_group_call(h_pad, ws, bs, *, TM, grid_m, use_bias, apply_selu):
    L = len(ws)
    M_pad, kin_p = h_pad.shape
    kout_p = ws[-1].shape[1]
    act_itemsize = h_pad.dtype.itemsize

    in_specs = [pl.BlockSpec((TM, kin_p), lambda i: (i, 0))]
    operands = [h_pad]
    # Weights/biases have a constant block index across the batch grid ->
    # single-buffer them (halves their VMEM residency vs the default 2x).
    for w in ws:
        in_specs.append(pl.BlockSpec(w.shape, lambda i: (0, 0),
                                     pipeline_mode=pl.Buffered(1)))
        operands.append(w)
    if use_bias:
        for b in bs:
            in_specs.append(pl.BlockSpec(b.shape, lambda i: (0, 0),
                                         pipeline_mode=pl.Buffered(1)))
            operands.append(b)

    out_spec = pl.BlockSpec((TM, kout_p), lambda i: (i, 0))

    w_bytes = sum(w.size * w.dtype.itemsize for w in ws)
    b_bytes = sum(b.size * b.dtype.itemsize for b in bs) if use_bias else 0
    act_tile_bytes = (TM * kin_p + TM * kout_p) * act_itemsize
    # weights/biases single-buffered, activation tiles double-buffered, plus
    # headroom for in-kernel f32 intermediates and compiler temporaries.
    vmem_limit = int(1.25 * (w_bytes + b_bytes + 2 * act_tile_bytes
                             + 2 * TM * max(kin_p, kout_p) * 4)) + (4 << 20)
    vmem_limit = min(max(vmem_limit, 16 << 20), _physical_vmem_bytes())

    flops = sum(2 * M_pad * w.shape[0] * w.shape[1] for w in ws)
    transc = sum(M_pad * w.shape[1] for w in ws) if apply_selu else 0
    bytes_accessed = (h_pad.size * act_itemsize + M_pad * kout_p * act_itemsize
                      + w_bytes + b_bytes)   # weights counted once, real dtypes

    kernel = functools.partial(_mlp_group_kernel, num_layers=L,
                               use_bias=use_bias, apply_selu=apply_selu)
    return pl.pallas_call(
        kernel,
        out_shape=jax.ShapeDtypeStruct((M_pad, kout_p), h_pad.dtype),
        grid_spec=pltpu.PrefetchScalarGridSpec(
            num_scalar_prefetch=0,
            grid=(grid_m,),
            in_specs=in_specs,
            out_specs=out_spec,
        ),
        compiler_params=pltpu.CompilerParams(
            dimension_semantics=("parallel",),   # batch axis -> 2 TCs on v7x
            vmem_limit_bytes=vmem_limit,
        ),
        cost_estimate=pl.CostEstimate(flops=flops, transcendentals=transc,
                                      bytes_accessed=bytes_accessed),
    )(*operands)


@functools.partial(jax.jit,
                   static_argnames=("output_dim", "use_bias", "apply_selu"))
def mlp_forward(x, w_stack, b_stack, *, output_dim, use_bias=True, apply_selu=True):
    """MLP forward.  The whole layer stack runs in ONE pallas_call whenever the
    resident weights fit the per-generation VMEM budget; otherwise consecutive
    layers are greedily grouped into as few VMEM-sized calls as possible."""
    M, K = x.shape
    kin_p0 = w_stack[0].shape[0]
    assert K <= kin_p0

    TM, grid_m = _choose_batch_tiling(M)
    M_pad = TM * grid_m

    # Only pad when needed (skips an extra HBM read+write when already aligned).
    if M_pad == M and K == kin_p0:
        h = x
    else:
        h = jnp.pad(x, ((0, M_pad - M), (0, kin_p0 - K)))

    # Per-generation fused-vs-grouped guard: keep resident weights under ~45%
    # of physical VMEM (v7x: 64 MiB, v5e/v6e: 128 MiB), leaving room for
    # activation double-buffers and compiler temporaries.
    budget = int(0.45 * _physical_vmem_bytes())
    groups = _plan_layer_groups(w_stack, budget)

    for group in groups:
        ws = tuple(w_stack[l] for l in group)
        bs = tuple(b_stack[l] for l in group)
        h = _mlp_group_call(h, ws, bs, TM=TM, grid_m=grid_m,
                            use_bias=use_bias, apply_selu=apply_selu)

    return h[:M, :output_dim]


# ----------------------------------------------------------------------------- reference
def mlp_reference(x, params, *, bias=True, activate_type='N'):
    """Pure-JAX reference (params already pre-transposed to [in, out])."""
    h = x
    for (w_t, b) in params:
        h = h @ w_t
        if bias:
            h = h + b
        if activate_type == 'N':
            h = SELU_SCALE * jnp.where(h > 0, h, SELU_ALPHA * (jnp.exp(h) - 1.0))
    return h


if __name__ == "__main__":
    key = jax.random.PRNGKey(0)
    batch, input_dim, hidden_dim, output_dim, layer_num = 8, 16, 32, 8, 3

    kx, kp = jax.random.split(key)
    x = jax.random.normal(kx, (batch, input_dim), jnp.float32)
    params = init_mlp_params(kp, input_dim, hidden_dim, output_dim, layer_num,
                             bias=True)
    ref = mlp_reference(x, params, bias=True, activate_type='N')

    # f32 weight storage: matches the f32 reference at tight tolerance.
    w_f32, b_f32 = pack_mlp_params(params, weight_dtype=jnp.float32)
    out = mlp_forward(x, w_f32, b_f32, output_dim=output_dim,
                      use_bias=True, apply_selu=True)
    out = jax.block_until_ready(out)
    assert out.shape == (batch, output_dim)
    assert jnp.allclose(out, ref, atol=1e-5, rtol=1e-5)

    # bf16 weight storage (half the weight DMA/VMEM, f32 MXU accumulation);
    # checked at a bf16-appropriate tolerance.
    w_bf16, b_bf16 = pack_mlp_params(params, weight_dtype=jnp.bfloat16)
    out_bf16 = mlp_forward(x, w_bf16, b_bf16, output_dim=output_dim,
                           use_bias=True, apply_selu=True)
    out_bf16 = jax.block_until_ready(out_bf16)
    assert out_bf16.shape == (batch, output_dim)
    assert jnp.allclose(out_bf16, ref, atol=5e-2, rtol=5e-2)

    print("KERNEL_OK")
</pallas_src>

<mosaic_0001>
module attributes {stable_mosaic.version = 11 : i64} {
  func.func @_mlp_group_kernel(%arg0: i32, %arg1: memref<8x128xf32, #tpu.memory_space<vmem>>, %arg2: memref<128x128xf32, #tpu.memory_space<vmem>>, %arg3: memref<128x128xf32, #tpu.memory_space<vmem>>, %arg4: memref<128x128xf32, #tpu.memory_space<vmem>>, %arg5: memref<1x128xf32, #tpu.memory_space<vmem>>, %arg6: memref<1x128xf32, #tpu.memory_space<vmem>>, %arg7: memref<1x128xf32, #tpu.memory_space<vmem>>, %arg8: memref<8x128xf32, #tpu.memory_space<vmem>>) attributes {dimension_semantics = [#tpu.dimension_semantics<parallel>], iteration_bounds = array<i64: 1>, scalar_prefetch = 0 : i64, scratch_operands = 0 : i64, tpu.core_type = #tpu.core_type<tc>, window_params = [{transform_indices = @transform_0, window_bounds = array<i64: 8, 128>}, {pipeline_mode = #tpu.pipeline_mode<synchronous>, transform_indices = @transform_1, window_bounds = array<i64: 128, 128>}, {pipeline_mode = #tpu.pipeline_mode<synchronous>, transform_indices = @transform_2, window_bounds = array<i64: 128, 128>}, {pipeline_mode = #tpu.pipeline_mode<synchronous>, transform_indices = @transform_3, window_bounds = array<i64: 128, 128>}, {pipeline_mode = #tpu.pipeline_mode<synchronous>, transform_indices = @transform_4, window_bounds = array<i64: 1, 128>}, {pipeline_mode = #tpu.pipeline_mode<synchronous>, transform_indices = @transform_5, window_bounds = array<i64: 1, 128>}, {pipeline_mode = #tpu.pipeline_mode<synchronous>, transform_indices = @transform_6, window_bounds = array<i64: 1, 128>}, {transform_indices = @transform_7, window_bounds = array<i64: 8, 128>}]} {
    %c0 = arith.constant 0 : index
    %c0_0 = arith.constant 0 : index
    %0 = vector.load %arg1[%c0, %c0_0] : memref<8x128xf32, #tpu.memory_space<vmem>>, vector<8x128xf32>
    %c0_1 = arith.constant 0 : index
    %c0_2 = arith.constant 0 : index
    %1 = vector.load %arg2[%c0_1, %c0_2] : memref<128x128xf32, #tpu.memory_space<vmem>>, vector<128x128xf32>
    %cst = arith.constant dense<0.000000e+00> : vector<8x128xf32>
    %2 = tpu.matmul %0, %1, %cst {dimension_numbers = #tpu.dot_dimension_numbers<[1], [0], [0], [1], [0, 0, 1, 1], [], []>} : vector<8x128xf32>, vector<128x128xf32>, vector<8x128xf32> -> vector<8x128xf32>
    %c0_3 = arith.constant 0 : index
    %c0_4 = arith.constant 0 : index
    %3 = vector.load %arg5[%c0_3, %c0_4] : memref<1x128xf32, #tpu.memory_space<vmem>>, vector<1x128xf32>
    %4 = vector.broadcast %3 : vector<1x128xf32> to vector<8x128xf32>
    %5 = arith.addf %2, %4 : vector<8x128xf32>
    %cst_5 = arith.constant 0.000000e+00 : f32
    %6 = vector.broadcast %cst_5 : f32 to vector<8x128xf32>
    %7 = arith.cmpf ogt, %5, %6 : vector<8x128xf32>
    %8 = math.exp %5 : vector<8x128xf32>
    %cst_6 = arith.constant 1.000000e+00 : f32
    %9 = vector.broadcast %cst_6 : f32 to vector<8x128xf32>
    %10 = arith.subf %8, %9 : vector<8x128xf32>
    %cst_7 = arith.constant 1.67326319 : f32
    %11 = vector.broadcast %cst_7 : f32 to vector<8x128xf32>
    %12 = arith.mulf %11, %10 : vector<8x128xf32>
    %13 = arith.select %7, %5, %12 : vector<8x128xi1>, vector<8x128xf32>
    %cst_8 = arith.constant 1.05070102 : f32
    %14 = vector.broadcast %cst_8 : f32 to vector<8x128xf32>
    %15 = arith.mulf %14, %13 : vector<8x128xf32>
    %c0_9 = arith.constant 0 : index
    %c0_10 = arith.constant 0 : index
    %16 = vector.load %arg3[%c0_9, %c0_10] : memref<128x128xf32, #tpu.memory_space<vmem>>, vector<128x128xf32>
    %cst_11 = arith.constant dense<0.000000e+00> : vector<8x128xf32>
    %17 = tpu.matmul %15, %16, %cst_11 {dimension_numbers = #tpu.dot_dimension_numbers<[1], [0], [0], [1], [0, 0, 1, 1], [], []>} : vector<8x128xf32>, vector<128x128xf32>, vector<8x128xf32> -> vector<8x128xf32>
    %c0_12 = arith.constant 0 : index
    %c0_13 = arith.constant 0 : index
    %18 = vector.load %arg6[%c0_12, %c0_13] : memref<1x128xf32, #tpu.memory_space<vmem>>, vector<1x128xf32>
    %19 = vector.broadcast %18 : vector<1x128xf32> to vector<8x128xf32>
    %20 = arith.addf %17, %19 : vector<8x128xf32>
    %cst_14 = arith.constant 0.000000e+00 : f32
    %21 = vector.broadcast %cst_14 : f32 to vector<8x128xf32>
    %22 = arith.cmpf ogt, %20, %21 : vector<8x128xf32>
    %23 = math.exp %20 : vector<8x128xf32>
    %cst_15 = arith.constant 1.000000e+00 : f32
    %24 = vector.broadcast %cst_15 : f32 to vector<8x128xf32>
    %25 = arith.subf %23, %24 : vector<8x128xf32>
    %cst_16 = arith.constant 1.67326319 : f32
    %26 = vector.broadcast %cst_16 : f32 to vector<8x128xf32>
    %27 = arith.mulf %26, %25 : vector<8x128xf32>
    %28 = arith.select %22, %20, %27 : vector<8x128xi1>, vector<8x128xf32>
    %cst_17 = arith.constant 1.05070102 : f32
    %29 = vector.broadcast %cst_17 : f32 to vector<8x128xf32>
    %30 = arith.mulf %29, %28 : vector<8x128xf32>
    %c0_18 = arith.constant 0 : index
    %c0_19 = arith.constant 0 : index
    %31 = vector.load %arg4[%c0_18, %c0_19] : memref<128x128xf32, #tpu.memory_space<vmem>>, vector<128x128xf32>
    %cst_20 = arith.constant dense<0.000000e+00> : vector<8x128xf32>
    %32 = tpu.matmul %30, %31, %cst_20 {dimension_numbers = #tpu.dot_dimension_numbers<[1], [0], [0], [1], [0, 0, 1, 1], [], []>} : vector<8x128xf32>, vector<128x128xf32>, vector<8x128xf32> -> vector<8x128xf32>
    %c0_21 = arith.constant 0 : index
    %c0_22 = arith.constant 0 : index
    %33 = vector.load %arg7[%c0_21, %c0_22] : memref<1x128xf32, #tpu.memory_space<vmem>>, vector<1x128xf32>
    %34 = vector.broadcast %33 : vector<1x128xf32> to vector<8x128xf32>
    %35 = arith.addf %32, %34 : vector<8x128xf32>
    %cst_23 = arith.constant 0.000000e+00 : f32
    %36 = vector.broadcast %cst_23 : f32 to vector<8x128xf32>
    %37 = arith.cmpf ogt, %35, %36 : vector<8x128xf32>
    %38 = math.exp %35 : vector<8x128xf32>
    %cst_24 = arith.constant 1.000000e+00 : f32
    %39 = vector.broadcast %cst_24 : f32 to vector<8x128xf32>
    %40 = arith.subf %38, %39 : vector<8x128xf32>
    %cst_25 = arith.constant 1.67326319 : f32
    %41 = vector.broadcast %cst_25 : f32 to vector<8x128xf32>
    %42 = arith.mulf %41, %40 : vector<8x128xf32>
    %43 = arith.select %37, %35, %42 : vector<8x128xi1>, vector<8x128xf32>
    %cst_26 = arith.constant 1.05070102 : f32
    %44 = vector.broadcast %cst_26 : f32 to vector<8x128xf32>
    %45 = arith.mulf %44, %43 : vector<8x128xf32>
    %c0_27 = arith.constant 0 : index
    %c0_28 = arith.constant 0 : index
    %46 = vector.load %arg8[%c0_27, %c0_28] : memref<8x128xf32, #tpu.memory_space<vmem>>, vector<8x128xf32>
    tpu.vector_store %arg8[%c0_27, %c0_28], %45 {strides = array<i32>} : memref<8x128xf32, #tpu.memory_space<vmem>>, vector<8x128xf32>,
    return
  }
  func.func @transform_0(%arg0: i32) -> (i32, i32) {
    %c0_i32 = arith.constant 0 : i32
    %c0_i32_0 = arith.constant 0 : i32
    return %arg0, %c0_i32 : i32, i32
  }
  func.func @transform_1(%arg0: i32) -> (i32, i32) {
    %c0_i32 = arith.constant 0 : i32
    %c0_i32_0 = arith.constant 0 : i32
    %c0_i32_1 = arith.constant 0 : i32
    return %c0_i32, %c0_i32_0 : i32, i32
  }
  func.func @transform_2(%arg0: i32) -> (i32, i32) {
    %c0_i32 = arith.constant 0 : i32
    %c0_i32_0 = arith.constant 0 : i32
    %c0_i32_1 = arith.constant 0 : i32
    return %c0_i32, %c0_i32_0 : i32, i32
  }
  func.func @transform_3(%arg0: i32) -> (i32, i32) {
    %c0_i32 = arith.constant 0 : i32
    %c0_i32_0 = arith.constant 0 : i32
    %c0_i32_1 = arith.constant 0 : i32
    return %c0_i32, %c0_i32_0 : i32, i32
  }
  func.func @transform_4(%arg0: i32) -> (i32, i32) {
    %c0_i32 = arith.constant 0 : i32
    %c0_i32_0 = arith.constant 0 : i32
    %c0_i32_1 = arith.constant 0 : i32
    return %c0_i32, %c0_i32_0 : i32, i32
  }
  func.func @transform_5(%arg0: i32) -> (i32, i32) {
    %c0_i32 = arith.constant 0 : i32
    %c0_i32_0 = arith.constant 0 : i32
    %c0_i32_1 = arith.constant 0 : i32
    return %c0_i32, %c0_i32_0 : i32, i32
  }
  func.func @transform_6(%arg0: i32) -> (i32, i32) {
    %c0_i32 = arith.constant 0 : i32
    %c0_i32_0 = arith.constant 0 : i32
    %c0_i32_1 = arith.constant 0 : i32
    return %c0_i32, %c0_i32_0 : i32, i32
  }
  func.func @transform_7(%arg0: i32) -> (i32, i32) {
    %c0_i32 = arith.constant 0 : i32
    %c0_i32_0 = arith.constant 0 : i32
    return %arg0, %c0_i32 : i32, i32
  }
}

</mosaic_0001>

<llo_original>
// kernel: mlp_forward.1
$region0: #{mlp_forward.1}
  #allocation0 [shape = 'u32[]', space=smem, size = 0x4, offset = 0x4, fixed_abs, tag = 'smem constant byte address 0x4 - core index']
  #allocation1 [shape = 'u32[144,128]{1,0:T(1,128)}', space=vmem, size = 0x12000, scoped, tag = 'internal scratch']
  %s0 = inlined_call_operand.vmem [shape: f32[8,128], index: 0, kind: input, shape index: {}]
  %s1 = inlined_call_operand.hbm [shape: f32[128,128], index: 1, kind: input, shape index: {}]
  %s2 = inlined_call_operand.hbm [shape: f32[128,128], index: 2, kind: input, shape index: {}]
  %s3 = inlined_call_operand.hbm [shape: f32[128,128], index: 3, kind: input, shape index: {}]
  %s4 = inlined_call_operand.vmem [shape: f32[1,128], index: 4, kind: input, shape index: {}]
  %s5 = inlined_call_operand.vmem [shape: f32[1,128], index: 5, kind: input, shape index: {}]
  %s6 = inlined_call_operand.vmem [shape: f32[1,128], index: 6, kind: input, shape index: {}]
  %s7 = inlined_call_operand.hbm [shape: f32[8,128], index: 7, kind: output, shape index: {}]
  %s8 = sld [smem:[#allocation0]]
  $region50: #{mlp_forward.1} parent=0
    _
  %s10 = ssub.s32 1, %s8
  %s11 = scalar_select 0, %s10, %s8
  $region1: #{mlp_forward.1} parent=0
    #allocation2 [shape = 'u8[65536]{0}', space=vmem, size = 0x10000, scoped, tag = 'input window, operand 1, single buffered']
    #allocation3 [shape = 's32[1]{0}', space=sflag, size = 0x4, scoped, tag = 'scoped memory for mlp_forward.1']
    #allocation4 [shape = 's32[1]{0}', space=sflag, size = 0x4, scoped, tag = 'scoped memory for mlp_forward.1']
    #allocation5 [shape = 'u8[65536]{0}', space=vmem, size = 0x10000, scoped, tag = 'input window, operand 2, single buffered']
    #allocation6 [shape = 's32[1]{0}', space=sflag, size = 0x4, scoped, tag = 'scoped memory for mlp_forward.1']
    #allocation7 [shape = 'u8[65536]{0}', space=vmem, size = 0x10000, scoped, tag = 'input window, operand 3, single buffered']
    #allocation8 [shape = 'u8[4096]{0}', space=vmem, size = 0x1000, scoped, tag = 'output window, operand 0, single buffered']
    %12 = vsyncpa [#allocation3], 0
    %13 = vsyncpa [#allocation6], 0
    %14 = vsyncpa [#allocation4], 0
    // Predicated region
    $region2: #{mlp_forward.1} parent=1 // pred_check
      _
    $region3: #{mlp_forward.1} parent=1 // pred_check_branch
      %16 = sbr.rel (0) target = $region5
    $region4: #{mlp_forward.1} parent=1 // pred_region
      _
    $region5: #{mlp_forward.1} parent=1 // pred_fallthru
      _
    // Predicated region
    $region6: #{mlp_forward.1} parent=1 // pred_check
      _
    $region7: #{mlp_forward.1} parent=1 // pred_check_branch
      %18 = sbr.rel (0) target = $region9
    $region8: #{mlp_forward.1} parent=1 // pred_region
      %s20 = ssub.s32 2048, 2048
      %21 = vsyncadd [#allocation3], %s20
      %s22 = sshll.u32 [#allocation2], 4
      %s23 = int_to_ptr.vmem [resolvable:$true] %s22
      %28 = dma.hbm_to_vmem [thread:$0]  %s1, 2048, %s23, [#allocation3], 128, 128, 8
    $region9: #{mlp_forward.1} parent=1 // pred_fallthru
      _
    // Predicated region
    $region10: #{mlp_forward.1} parent=1 // pred_check
      _
    $region11: #{mlp_forward.1} parent=1 // pred_check_branch
      %30 = sbr.rel (0) target = $region13
    $region12: #{mlp_forward.1} parent=1 // pred_region
      %s32 = ssub.s32 2048, 2048
      %33 = vsyncadd [#allocation6], %s32
      %s34 = sshll.u32 [#allocation5], 4
      %s35 = int_to_ptr.vmem [resolvable:$true] %s34
      %40 = dma.hbm_to_vmem [thread:$0]  %s2, 2048, %s35, [#allocation6], 128, 128, 8
    $region13: #{mlp_forward.1} parent=1 // pred_fallthru
      _
    // Predicated region
    $region14: #{mlp_forward.1} parent=1 // pred_check
      _
    $region15: #{mlp_forward.1} parent=1 // pred_check_branch
      %42 = sbr.rel (0) target = $region17
    $region16: #{mlp_forward.1} parent=1 // pred_region
      %s44 = ssub.s32 2048, 2048
      %45 = vsyncadd [#allocation6], %s44
      %s46 = sshll.u32 [#allocation7], 4
      %s47 = int_to_ptr.vmem [resolvable:$true] %s46
      %52 = dma.hbm_to_vmem [thread:$0]  %s3, 2048, %s47, [#allocation6], 128, 128, 8
    $region17: #{mlp_forward.1} parent=1 // pred_fallthru
      _
    // Predicated region
    $region18: #{mlp_forward.1} parent=1 // pred_check
      _
    $region19: #{mlp_forward.1} parent=1 // pred_check_branch
      %54 = sbr.rel (0) target = $region21
    $region20: #{mlp_forward.1} parent=1 // pred_region
      _
    $region21: #{mlp_forward.1} parent=1 // pred_fallthru
      _
    // Predicated region
    $region22: #{mlp_forward.1} parent=1 // pred_check
      _
    $region23: #{mlp_forward.1} parent=1 // pred_check_branch
      %56 = sbr.rel (0) target = $region25
    $region24: #{mlp_forward.1} parent=1 // pred_region
      _
    $region25: #{mlp_forward.1} parent=1 // pred_fallthru
      _
    // Predicated region
    $region26: #{mlp_forward.1} parent=1 // pred_check
      _
    $region27: #{mlp_forward.1} parent=1 // pred_check_branch
      %58 = sbr.rel (0) target = $region29
    $region28: #{mlp_forward.1} parent=1 // pred_region
      _
    $region29: #{mlp_forward.1} parent=1 // pred_fallthru
      _
    // Predicated region
    $region30: #{mlp_forward.1} parent=1 // pred_check
      _
    $region31: #{mlp_forward.1} parent=1 // pred_check_branch
      %60 = sbr.rel (0) target = $region33
    $region32: #{mlp_forward.1} parent=1 // pred_region
      %61 = dma.done [#allocation3], 2048
    $region33: #{mlp_forward.1} parent=1 // pred_fallthru
      _
    // Predicated region
    $region34: #{mlp_forward.1} parent=1 // pred_check
      _
    $region35: #{mlp_forward.1} parent=1 // pred_check_branch
      %63 = sbr.rel (0) target = $region37
    $region36: #{mlp_forward.1} parent=1 // pred_region
      %64 = dma.done [#allocation6], 2048
    $region37: #{mlp_forward.1} parent=1 // pred_fallthru
      _
    // Predicated region
    $region38: #{mlp_forward.1} parent=1 // pred_check
      _
    $region39: #{mlp_forward.1} parent=1 // pred_check_branch
      %66 = sbr.rel (0) target = $region41
    $region40: #{mlp_forward.1} parent=1 // pred_region
      %67 = dma.done [#allocation6], 2048
    $region41: #{mlp_forward.1} parent=1 // pred_fallthru
      _
    %v68 = vld [vmem:[%s0] sm:$0xff]
    %v69 = vld [vmem:[#allocation2] sm:$0xff]
    %v70 = vld [vmem:[#allocation2 + $0x8] sm:$0xff]
    %v71 = vld [vmem:[#allocation2 + $0x10] sm:$0xff]
    %v72 = vld [vmem:[#allocation2 + $0x18] sm:$0xff]
    %v73 = vld [vmem:[#allocation2 + $0x20] sm:$0xff]
    %v74 = vld [vmem:[#allocation2 + $0x28] sm:$0xff]
    %v75 = vld [vmem:[#allocation2 + $0x30] sm:$0xff]
    %v76 = vld [vmem:[#allocation2 + $0x38] sm:$0xff]
    %v77 = vld [vmem:[#allocation2 + $0x40] sm:$0xff]
    %v78 = vld [vmem:[#allocation2 + $0x48] sm:$0xff]
    %v79 = vld [vmem:[#allocation2 + $0x50] sm:$0xff]
    %v80 = vld [vmem:[#allocation2 + $0x58] sm:$0xff]
    %v81 = vld [vmem:[#allocation2 + $0x60] sm:$0xff]
    %v82 = vld [vmem:[#allocation2 + $0x68] sm:$0xff]
    %v83 = vld [vmem:[#allocation2 + $0x70] sm:$0xff]
    %v84 = vld [vmem:[#allocation2 + $0x78] sm:$0xff]
    %v85 = vld [vmem:[%s4] sm:$0x1]
    %v87 = vlaneseq
    %v88 = vshrl.u32 %v87, 7
    %v89 = vsub.s32 0, %v88
    %v90 = vrot.slane %v85, %v89
    %92 = vmatprep.subr.mxu0 0.0
    %93 = vmatpush1.msra.mxu0 %v84
    %94 = vmatprep.subr.mxu0 0.0
    %95 = vmatpush1.msra.mxu0 %v83
    %96 = vmatprep.subr.mxu0 0.0
    %97 = vmatpush1.msra.mxu0 %v82
    %98 = vmatprep.subr.mxu0 0.0
    %99 = vmatpush1.msra.mxu0 %v81
    %100 = vmatprep.subr.mxu0 0.0
    %101 = vmatpush1.msra.mxu0 %v80
    %102 = vmatprep.subr.mxu0 0.0
    %103 = vmatpush1.msra.mxu0 %v79
    %104 = vmatprep.subr.mxu0 0.0
    %105 = vmatpush1.msra.mxu0 %v78
    %106 = vmatprep.subr.mxu0 0.0
    %107 = vmatpush1.msra.mxu0 %v77
    %108 = vmatprep.subr.mxu0 0.0
    %109 = vmatpush1.msra.mxu0 %v76
    %110 = vmatprep.subr.mxu0 0.0
    %111 = vmatpush1.msra.mxu0 %v75
    %112 = vmatprep.subr.mxu0 0.0
    %113 = vmatpush1.msra.mxu0 %v74
    %114 = vmatprep.subr.mxu0 0.0
    %115 = vmatpush1.msra.mxu0 %v73
    %116 = vmatprep.subr.mxu0 0.0
    %117 = vmatpush1.msra.mxu0 %v72
    %118 = vmatprep.subr.mxu0 0.0
    %119 = vmatpush1.msra.mxu0 %v71
    %120 = vmatprep.subr.mxu0 0.0
    %121 = vmatpush1.msra.mxu0 %v70
    %122 = vmatprep.subr.mxu0 0.0
    %123 = vmatpush1.msra.mxu0 %v69
    %124 = vmatprep.subr.mxu0 0.0
    %125 = vmatpush2.msra.mxu0 0.0
    %126 = vmatprep.subr.mxu0 0.0
    %127 = vmatpush2.msra.mxu0 0.0
    %128 = vmatprep.subr.mxu0 0.0
    %129 = vmatpush2.msra.mxu0 0.0
    %130 = vmatprep.subr.mxu0 0.0
    %131 = vmatpush2.msra.mxu0 0.0
    %132 = vmatprep.subr.mxu0 0.0
    %133 = vmatpush2.msra.mxu0 0.0
    %134 = vmatprep.subr.mxu0 0.0
    %135 = vmatpush2.msra.mxu0 0.0
    %136 = vmatprep.subr.mxu0 0.0
    %137 = vmatpush2.msra.mxu0 0.0
    %138 = vmatprep.subr.mxu0 0.0
    %139 = vmatpush2.msra.mxu0 0.0
    %140 = vmatprep.subr.mxu0 0.0
    %141 = vmatpush2.msra.mxu0 0.0
    %142 = vmatprep.subr.mxu0 0.0
    %143 = vmatpush2.msra.mxu0 0.0
    %144 = vmatprep.subr.mxu0 0.0
    %145 = vmatpush2.msra.mxu0 0.0
    %146 = vmatprep.subr.mxu0 0.0
    %147 = vmatpush2.msra.mxu0 0.0
    %148 = vmatprep.subr.mxu0 0.0
    %149 = vmatpush2.msra.mxu0 0.0
    %150 = vmatprep.subr.mxu0 0.0
    %151 = vmatpush2.msra.mxu0 0.0
    %152 = vmatprep.subr.mxu0 0.0
    %153 = vmatpush2.msra.mxu0 0.0
    %154 = vmatprep.subr.mxu0 0.0
    %155 = vmatpush2.msra.mxu0 0.0
    %156 = vmatprep.mubr.f32.mxu0 0.0
    %157 = vmatmul.mubr.f32.gmra.mxu0 %v68
    %v158 = vpop.f32.mrf.mxu0
    %v159 = vadd.f32 %v90, %v158
    %v160 = vpop.f32.mrf.mxu0
    %161 = vdwg.mxu0
    %vm162 = vcmp.gt.f32.partialorder %v159, 0.0
    %v163 = vmul.f32 %v159, 1.442695
    %v164 = vpow.pop %v163
    %v165 = vsub.f32 %v164, 1.0
    %v166 = vmul.f32 %v165, 1.6732632
    %v167 = vsel %vm162, %v159, %v166
    %v168 = vmul.f32 %v167, 1.050701
    %v169 = vld [vmem:[#allocation5] sm:$0xff]
    %v170 = vld [vmem:[#allocation5 + $0x8] sm:$0xff]
    %v171 = vld [vmem:[#allocation5 + $0x10] sm:$0xff]
    %v172 = vld [vmem:[#allocation5 + $0x18] sm:$0xff]
    %v173 = vld [vmem:[#allocation5 + $0x20] sm:$0xff]
    %v174 = vld [vmem:[#allocation5 + $0x28] sm:$0xff]
    %v175 = vld [vmem:[#allocation5 + $0x30] sm:$0xff]
    %v176 = vld [vmem:[#allocation5 + $0x38] sm:$0xff]
    %v177 = vld [vmem:[#allocation5 + $0x40] sm:$0xff]
    %v178 = vld [vmem:[#allocation5 + $0x48] sm:$0xff]
    %v179 = vld [vmem:[#allocation5 + $0x50] sm:$0xff]
    %v180 = vld [vmem:[#allocation5 + $0x58] sm:$0xff]
    %v181 = vld [vmem:[#allocation5 + $0x60] sm:$0xff]
    %v182 = vld [vmem:[#allocation5 + $0x68] sm:$0xff]
    %v183 = vld [vmem:[#allocation5 + $0x70] sm:$0xff]
    %v184 = vld [vmem:[#allocation5 + $0x78] sm:$0xff]
    %v185 = vld [vmem:[%s5] sm:$0x1]
    %v187 = vlaneseq
    %v188 = vshrl.u32 %v187, 7
    %v189 = vsub.s32 0, %v188
    %v190 = vrot.slane %v185, %v189
    %192 = vmatprep.subr.mxu0 0.0
    %193 = vmatpush1.msra.mxu0 %v184
    %194 = vmatprep.subr.mxu0 0.0
    %195 = vmatpush1.msra.mxu0 %v183
    %196 = vmatprep.subr.mxu0 0.0
    %197 = vmatpush1.msra.mxu0 %v182
    %198 = vmatprep.subr.mxu0 0.0
    %199 = vmatpush1.msra.mxu0 %v181
    %200 = vmatprep.subr.mxu0 0.0
    %201 = vmatpush1.msra.mxu0 %v180
    %202 = vmatprep.subr.mxu0 0.0
    %203 = vmatpush1.msra.mxu0 %v179
    %204 = vmatprep.subr.mxu0 0.0
    %205 = vmatpush1.msra.mxu0 %v178
    %206 = vmatprep.subr.mxu0 0.0
    %207 = vmatpush1.msra.mxu0 %v177
    %208 = vmatprep.subr.mxu0 0.0
    %209 = vmatpush1.msra.mxu0 %v176
    %210 = vmatprep.subr.mxu0 0.0
    %211 = vmatpush1.msra.mxu0 %v175
    %212 = vmatprep.subr.mxu0 0.0
    %213 = vmatpush1.msra.mxu0 %v174
    %214 = vmatprep.subr.mxu0 0.0
    %215 = vmatpush1.msra.mxu0 %v173
    %216 = vmatprep.subr.mxu0 0.0
    %217 = vmatpush1.msra.mxu0 %v172
    %218 = vmatprep.subr.mxu0 0.0
    %219 = vmatpush1.msra.mxu0 %v171
    %220 = vmatprep.subr.mxu0 0.0
    %221 = vmatpush1.msra.mxu0 %v170
    %222 = vmatprep.subr.mxu0 0.0
    %223 = vmatpush1.msra.mxu0 %v169
    %224 = vmatprep.subr.mxu0 0.0
    %225 = vmatpush2.msra.mxu0 0.0
    %226 = vmatprep.subr.mxu0 0.0
    %227 = vmatpush2.msra.mxu0 0.0
    %228 = vmatprep.subr.mxu0 0.0
    %229 = vmatpush2.msra.mxu0 0.0
    %230 = vmatprep.subr.mxu0 0.0
    %231 = vmatpush2.msra.mxu0 0.0
    %232 = vmatprep.subr.mxu0 0.0
    %233 = vmatpush2.msra.mxu0 0.0
    %234 = vmatprep.subr.mxu0 0.0
    %235 = vmatpush2.msra.mxu0 0.0
    %236 = vmatprep.subr.mxu0 0.0
    %237 = vmatpush2.msra.mxu0 0.0
    %238 = vmatprep.subr.mxu0 0.0
    %239 = vmatpush2.msra.mxu0 0.0
    %240 = vmatprep.subr.mxu0 0.0
    %241 = vmatpush2.msra.mxu0 0.0
    %242 = vmatprep.subr.mxu0 0.0
    %243 = vmatpush2.msra.mxu0 0.0
    %244 = vmatprep.subr.mxu0 0.0
    %245 = vmatpush2.msra.mxu0 0.0
    %246 = vmatprep.subr.mxu0 0.0
    %247 = vmatpush2.msra.mxu0 0.0
    %248 = vmatprep.subr.mxu0 0.0
    %249 = vmatpush2.msra.mxu0 0.0
    %250 = vmatprep.subr.mxu0 0.0
    %251 = vmatpush2.msra.mxu0 0.0
    %252 = vmatprep.subr.mxu0 0.0
    %253 = vmatpush2.msra.mxu0 0.0
    %254 = vmatprep.subr.mxu0 0.0
    %255 = vmatpush2.msra.mxu0 0.0
    %256 = vmatprep.mubr.f32.mxu0 0.0
    %257 = vmatmul.mubr.f32.gmra.mxu0 %v168
    %v258 = vpop.f32.mrf.mxu0
    %v259 = vadd.f32 %v190, %v258
    %v260 = vpop.f32.mrf.mxu0
    %261 = vdwg.mxu0
    %vm262 = vcmp.gt.f32.partialorder %v259, 0.0
    %v263 = vmul.f32 %v259, 1.442695
    %v264 = vpow.pop %v263
    %v265 = vsub.f32 %v264, 1.0
    %v266 = vmul.f32 %v265, 1.6732632
    %v267 = vsel %vm262, %v259, %v266
    %v268 = vmul.f32 %v267, 1.050701
    %v269 = vld [vmem:[#allocation7] sm:$0xff]
    %v270 = vld [vmem:[#allocation7 + $0x8] sm:$0xff]
    %v271 = vld [vmem:[#allocation7 + $0x10] sm:$0xff]
    %v272 = vld [vmem:[#allocation7 + $0x18] sm:$0xff]
    %v273 = vld [vmem:[#allocation7 + $0x20] sm:$0xff]
    %v274 = vld [vmem:[#allocation7 + $0x28] sm:$0xff]
    %v275 = vld [vmem:[#allocation7 + $0x30] sm:$0xff]
    %v276 = vld [vmem:[#allocation7 + $0x38] sm:$0xff]
    %v277 = vld [vmem:[#allocation7 + $0x40] sm:$0xff]
    %v278 = vld [vmem:[#allocation7 + $0x48] sm:$0xff]
    %v279 = vld [vmem:[#allocation7 + $0x50] sm:$0xff]
    %v280 = vld [vmem:[#allocation7 + $0x58] sm:$0xff]
    %v281 = vld [vmem:[#allocation7 + $0x60] sm:$0xff]
    %v282 = vld [vmem:[#allocation7 + $0x68] sm:$0xff]
    %v283 = vld [vmem:[#allocation7 + $0x70] sm:$0xff]
    %v284 = vld [vmem:[#allocation7 + $0x78] sm:$0xff]
    %v285 = vld [vmem:[%s6] sm:$0x1]
    %v287 = vlaneseq
    %v288 = vshrl.u32 %v287, 7
    %v289 = vsub.s32 0, %v288
    %v290 = vrot.slane %v285, %v289
    %292 = vmatprep.subr.mxu0 0.0
    %293 = vmatpush1.msra.mxu0 %v284
    %294 = vmatprep.subr.mxu0 0.0
    %295 = vmatpush1.msra.mxu0 %v283
    %296 = vmatprep.subr.mxu0 0.0
    %297 = vmatpush1.msra.mxu0 %v282
    %298 = vmatprep.subr.mxu0 0.0
    %299 = vmatpush1.msra.mxu0 %v281
    %300 = vmatprep.subr.mxu0 0.0
    %301 = vmatpush1.msra.mxu0 %v280
    %302 = vmatprep.subr.mxu0 0.0
    %303 = vmatpush1.msra.mxu0 %v279
    %304 = vmatprep.subr.mxu0 0.0
    %305 = vmatpush1.msra.mxu0 %v278
    %306 = vmatprep.subr.mxu0 0.0
    %307 = vmatpush1.msra.mxu0 %v277
    %308 = vmatprep.subr.mxu0 0.0
    %309 = vmatpush1.msra.mxu0 %v276
    %310 = vmatprep.subr.mxu0 0.0
    %311 = vmatpush1.msra.mxu0 %v275
    %312 = vmatprep.subr.mxu0 0.0
    %313 = vmatpush1.msra.mxu0 %v274
    %314 = vmatprep.subr.mxu0 0.0
    %315 = vmatpush1.msra.mxu0 %v273
    %316 = vmatprep.subr.mxu0 0.0
    %317 = vmatpush1.msra.mxu0 %v272
    %318 = vmatprep.subr.mxu0 0.0
    %319 = vmatpush1.msra.mxu0 %v271
    %320 = vmatprep.subr.mxu0 0.0
    %321 = vmatpush1.msra.mxu0 %v270
    %322 = vmatprep.subr.mxu0 0.0
    %323 = vmatpush1.msra.mxu0 %v269
    %324 = vmatprep.subr.mxu0 0.0
    %325 = vmatpush2.msra.mxu0 0.0
    %326 = vmatprep.subr.mxu0 0.0
    %327 = vmatpush2.msra.mxu0 0.0
    %328 = vmatprep.subr.mxu0 0.0
    %329 = vmatpush2.msra.mxu0 0.0
    %330 = vmatprep.subr.mxu0 0.0
    %331 = vmatpush2.msra.mxu0 0.0
    %332 = vmatprep.subr.mxu0 0.0
    %333 = vmatpush2.msra.mxu0 0.0
    %334 = vmatprep.subr.mxu0 0.0
    %335 = vmatpush2.msra.mxu0 0.0
    %336 = vmatprep.subr.mxu0 0.0
    %337 = vmatpush2.msra.mxu0 0.0
    %338 = vmatprep.subr.mxu0 0.0
    %339 = vmatpush2.msra.mxu0 0.0
    %340 = vmatprep.subr.mxu0 0.0
    %341 = vmatpush2.msra.mxu0 0.0
    %342 = vmatprep.subr.mxu0 0.0
    %343 = vmatpush2.msra.mxu0 0.0
    %344 = vmatprep.subr.mxu0 0.0
    %345 = vmatpush2.msra.mxu0 0.0
    %346 = vmatprep.subr.mxu0 0.0
    %347 = vmatpush2.msra.mxu0 0.0
    %348 = vmatprep.subr.mxu0 0.0
    %349 = vmatpush2.msra.mxu0 0.0
    %350 = vmatprep.subr.mxu0 0.0
    %351 = vmatpush2.msra.mxu0 0.0
    %352 = vmatprep.subr.mxu0 0.0
    %353 = vmatpush2.msra.mxu0 0.0
    %354 = vmatprep.subr.mxu0 0.0
    %355 = vmatpush2.msra.mxu0 0.0
    %356 = vmatprep.mubr.f32.mxu0 0.0
    %357 = vmatmul.mubr.f32.gmra.mxu0 %v268
    %v358 = vpop.f32.mrf.mxu0
    %v359 = vadd.f32 %v290, %v358
    %v360 = vpop.f32.mrf.mxu0
    %361 = vdwg.mxu0
    %vm362 = vcmp.gt.f32.partialorder %v359, 0.0
    %v363 = vmul.f32 %v359, 1.442695
    %v364 = vpow.pop %v363
    %v365 = vsub.f32 %v364, 1.0
    %v366 = vmul.f32 %v365, 1.6732632
    %v367 = vsel %vm362, %v359, %v366
    %v368 = vmul.f32 %v367, 1.050701
    %369 = vst [vmem:[#allocation8] sm:$0xff] %v368
    // Predicated region
    $region42: #{mlp_forward.1} parent=1 // pred_check
      _
    $region43: #{mlp_forward.1} parent=1 // pred_check_branch
      %371 = sbr.rel (0) target = $region45
    $region44: #{mlp_forward.1} parent=1 // pred_region
      %s373 = ssub.s32 128, 128
      %374 = vsyncadd [#allocation4], %s373
      %s376 = sshll.u32 [#allocation8], 4
      %s377 = int_to_ptr.vmem [resolvable:$true] %s376
      %379 = dma.vmem_to_hbm [thread:$0]  %s377, 128, %s7, [#allocation4]
    $region45: #{mlp_forward.1} parent=1 // pred_fallthru
      _
    // Predicated region
    $region46: #{mlp_forward.1} parent=1 // pred_check
      _
    $region47: #{mlp_forward.1} parent=1 // pred_check_branch
      %381 = sbr.rel (0) target = $region49
    $region48: #{mlp_forward.1} parent=1 // pred_region
      %382 = dma.done [#allocation4], 128
    $region49: #{mlp_forward.1} parent=1 // pred_fallthru
      _
    %383 = vsyncpa [#allocation3], 1
    %384 = vsyncpa [#allocation6], 1
    %385 = vsyncpa [#allocation4], 1

</llo_original>
